<compile_context>
chip_gen: v6e
topology: v6e:2x2x1
jax: 0.10.0
libtpu: 0.0.40
codegen_flags: <defaults>
</compile_context>

<pallas_src>
import jax
import jax.numpy as jnp
from jax.experimental import pallas as pl
from jax.experimental.pallas import tpu as pltpu

_MIB = 1024 * 1024


def _classifier_head_kernel(x_ref, w_ref, b_ref, o_ref):
    # x_ref: (TM, D) VMEM tile of activations (pipelined over the batch grid).
    # w_ref: (1, D)  lane-dense weight, VMEM-resident across all grid steps.
    # b_ref: (1, 1)  bias scalar in SMEM.
    # o_ref: (1, 1, TM) lane-dense output row for this tile.
    prod = x_ref[...] * w_ref[...]                        # native-dtype VPU multiply
    acc = jnp.sum(prod, axis=-1, dtype=jnp.float32)       # (TM,), f32 lane reduce (XLU)
    row = acc + b_ref[0, 0]
    o_ref[...] = row[None, None, :].astype(o_ref.dtype)   # unmasked lane-dense store


def _round_up(n, m):
    return (n + m - 1) // m * m


def _round_down(n, m):
    return n // m * m


def _plan_tiles(batch, d, itemsize,
                vmem_budget_bytes=28 * _MIB,
                headroom_bytes=2 * _MIB,
                min_split_bytes=4 * _MIB):
    """Pick the batch tile TM and an explicit scoped-VMEM limit.

    Accounts for all VMEM consumers: the double-buffered x window, the
    (sublane-padded) resident weight, the elementwise product / f32-upcast
    working set, the lane-dense output double buffer, plus spill headroom.
    """
    rows8 = _round_up(max(batch, 1), 8)
    # Steady-state VMEM bytes consumed per activation row.
    per_row = d * (2 * itemsize                        # double-buffered x tile
                   + itemsize                          # x*w product intermediate
                   + (4 if itemsize < 4 else 0))       # f32 upcast feeding the reduce
    fixed = 2 * 8 * d * itemsize + headroom_bytes      # resident (sublane-padded) weight

    if rows8 * d * itemsize <= min_split_bytes:
        tm = rows8                                     # tiny problem: a single tile
    else:
        tm = max((vmem_budget_bytes - fixed) // per_row, 8)
        # Keep >= 4 grid steps so v7x's two TensorCores each get a pipeline.
        tm = min(tm, pl.cdiv(rows8, 4))
        gran = 128 if tm >= 128 else 8                 # lane-dense + sublane aligned
        tm = max(_round_down(tm, gran), 8)
        tm = min(tm, rows8)

    num_tiles = pl.cdiv(batch, tm)
    out_bytes = 2 * max(tm, 128) * 4                   # double-buffered output row
    vmem_limit = per_row * tm + fixed + out_bytes + 4 * _MIB
    vmem_limit = min(int(vmem_limit), 30 * _MIB)       # legal on v5e/v6e/v7x
    return tm, num_tiles, vmem_limit


def classifier_head(x, w, b):
    """x: (B, D), w: (1, D) (PyTorch nn.Linear layout), b: (1,) -> (B, 1) float32."""
    B, D = x.shape
    assert w.shape == (1, D)
    b2 = jnp.reshape(b, (1, 1)).astype(jnp.float32)

    tm, num_tiles, vmem_limit = _plan_tiles(B, D, x.dtype.itemsize)

    out = pl.pallas_call(
        _classifier_head_kernel,
        out_shape=jax.ShapeDtypeStruct((num_tiles, 1, tm), jnp.float32),
        grid_spec=pltpu.PrefetchScalarGridSpec(
            num_scalar_prefetch=0,
            grid=(num_tiles,),
            in_specs=[
                pl.BlockSpec((tm, D), lambda i: (i, 0)),             # batch-tiled x (ragged tail OK)
                pl.BlockSpec((1, D), lambda i: (0, 0)),              # VMEM-resident weight
                pl.BlockSpec(memory_space=pltpu.MemorySpace.SMEM),   # bias scalar
            ],
            out_specs=pl.BlockSpec((1, 1, tm), lambda i: (i, 0, 0)),  # lane-dense out row
        ),
        compiler_params=pltpu.CompilerParams(
            dimension_semantics=("parallel",),
            vmem_limit_bytes=vmem_limit,
        ),
        cost_estimate=pl.CostEstimate(
            flops=2 * B * D,
            transcendentals=0,
            bytes_accessed=B * D * x.dtype.itemsize + D * w.dtype.itemsize + 4 + B * 4,
        ),
    )(x, w, b2)

    # INVARIANT: rows past B in the last (ragged) tile hold uninitialized
    # garbage; this [:B] slice is what makes dropping the jnp.pad safe.
    return out.reshape(-1)[:B].reshape(B, 1)


if __name__ == "__main__":
    key = jax.random.PRNGKey(0)
    kx, kw, kb = jax.random.split(key, 3)

    # Small shapes consistent with the module: batch=8 tokens, hidden=32.
    B, D = 8, 32

    x = jax.random.normal(kx, (B, D), dtype=jnp.float32)

    # Deterministic parameter init (mimics nn.Linear uniform init bounds).
    bound = 1.0 / jnp.sqrt(jnp.float32(D))
    w = jax.random.uniform(kw, (1, D), minval=-bound, maxval=bound,
                           dtype=jnp.float32)        # PyTorch layout: (out=1, in=D)
    b = jax.random.uniform(kb, (1,), minval=-bound, maxval=bound,
                           dtype=jnp.float32)

    out = classifier_head(x, w, b)
    out = jax.block_until_ready(out)

    # Reference check in plain JAX.
    ref = x @ w.T + b
    assert out.shape == (B, 1)
    assert jnp.allclose(out, ref, atol=1e-5, rtol=1e-5)

    print("KERNEL_OK")
</pallas_src>

<mosaic_0001>
module attributes {stable_mosaic.version = 11 : i64} {
  func.func @_classifier_head_kernel(%arg0: i32, %arg1: memref<8x32xf32, #tpu.memory_space<vmem>>, %arg2: memref<1x32xf32, #tpu.memory_space<vmem>>, %arg3: memref<1x1xf32, #tpu.memory_space<smem>>, %arg4: memref<1x1x8xf32, #tpu.memory_space<vmem>>) attributes {dimension_semantics = [#tpu.dimension_semantics<parallel>], iteration_bounds = array<i64: 1>, scalar_prefetch = 0 : i64, scratch_operands = 0 : i64, tpu.core_type = #tpu.core_type<tc>, window_params = [{transform_indices = @transform_0, window_bounds = array<i64: 8, 32>}, {pipeline_mode = #tpu.pipeline_mode<synchronous>, transform_indices = @transform_1, window_bounds = array<i64: 1, 32>}, {transform_indices = @transform_2, window_bounds = array<i64: 1, 1>}, {transform_indices = @transform_3, window_bounds = array<i64: 1, 1, 8>}]} {
    %c0 = arith.constant 0 : index
    %c0_0 = arith.constant 0 : index
    %0 = vector.load %arg1[%c0, %c0_0] : memref<8x32xf32, #tpu.memory_space<vmem>>, vector<8x32xf32>
    %c0_1 = arith.constant 0 : index
    %c0_2 = arith.constant 0 : index
    %1 = vector.load %arg2[%c0_1, %c0_2] : memref<1x32xf32, #tpu.memory_space<vmem>>, vector<1x32xf32>
    %2 = vector.broadcast %1 : vector<1x32xf32> to vector<8x32xf32>
    %3 = arith.mulf %0, %2 : vector<8x32xf32>
    %cst = arith.constant dense<0.000000e+00> : vector<8xf32>
    %4 = vector.multi_reduction <add>, %3, %cst [1] : vector<8x32xf32> to vector<8xf32>
    %c0_3 = arith.constant 0 : index
    %c0_4 = arith.constant 0 : index
    %5 = memref.load %arg3[%c0_3, %c0_4] : memref<1x1xf32, #tpu.memory_space<smem>>
    %6 = vector.broadcast %5 : f32 to vector<8xf32>
    %7 = arith.addf %4, %6 : vector<8xf32>
    %8 = vector.shape_cast %7 : vector<8xf32> to vector<1x1x8xf32>
    %c0_5 = arith.constant 0 : index
    %c0_6 = arith.constant 0 : index
    %c0_7 = arith.constant 0 : index
    %9 = vector.load %arg4[%c0_5, %c0_6, %c0_7] : memref<1x1x8xf32, #tpu.memory_space<vmem>>, vector<1x1x8xf32>
    tpu.vector_store %arg4[%c0_5, %c0_6, %c0_7], %8 {strides = array<i32>} : memref<1x1x8xf32, #tpu.memory_space<vmem>>, vector<1x1x8xf32>,
    return
  }
  func.func @transform_0(%arg0: i32) -> (i32, i32) {
    %c0_i32 = arith.constant 0 : i32
    %c0_i32_0 = arith.constant 0 : i32
    return %arg0, %c0_i32 : i32, i32
  }
  func.func @transform_1(%arg0: i32) -> (i32, i32) {
    %c0_i32 = arith.constant 0 : i32
    %c0_i32_0 = arith.constant 0 : i32
    %c0_i32_1 = arith.constant 0 : i32
    return %c0_i32, %c0_i32_0 : i32, i32
  }
  func.func @transform_2(%arg0: i32) -> (i32, i32) {
    %c0_i32 = arith.constant 0 : i32
    %c0_i32_0 = arith.constant 0 : i32
    %c0_i32_1 = arith.constant 0 : i32
    return %c0_i32, %c0_i32_0 : i32, i32
  }
  func.func @transform_3(%arg0: i32) -> (i32, i32, i32) {
    %c0_i32 = arith.constant 0 : i32
    %c0_i32_0 = arith.constant 0 : i32
    %c0_i32_1 = arith.constant 0 : i32
    return %arg0, %c0_i32, %c0_i32_0 : i32, i32, i32
  }
}

</mosaic_0001>

<llo_original>
// kernel: tpu_custom_call.1
$region0: #{tpu_custom_call.1}
  #allocation0 [shape = 'u32[]', space=smem, size = 0x4, offset = 0x4, fixed_abs, tag = 'smem constant byte address 0x4 - core index']
  #allocation1 [shape = 'u32[144,128]{1,0:T(1,128)}', space=vmem, size = 0x12000, scoped, tag = 'internal scratch']
  #allocation2 [shape = 'f32[1,1]{1,0:T(1,128)S(6)}', space=smem, size = 0x200, scoped, tag = 'scoped memory for tpu_custom_call.1']
  %s0 = inlined_call_operand.hbm [shape: f32[8,32], index: 0, kind: input, shape index: {}]
  %s1 = inlined_call_operand.vmem [shape: f32[1,32], index: 1, kind: input, shape index: {}]
  %s2 = inlined_call_operand.<no memory space> [shape: f32[1,1], index: 2, kind: input, shape index: {}]
  %s3 = inlined_call_operand.hbm [shape: f32[1,1,8], index: 3, kind: output, shape index: {}]
  %s4 = sld [smem:[#allocation0]]
  $region26: #{tpu_custom_call.1} parent=0
    _
  %s6 = ssub.s32 1, %s4
  %s7 = scalar_select 0, %s6, %s4
  %8 = sst [smem:[#allocation2]] %s2
  $region1: #{tpu_custom_call.1} parent=0
    #allocation3 [shape = 'u8[4096]{0}', space=vmem, size = 0x1000, scoped, tag = 'input window, operand 0, single buffered']
    #allocation4 [shape = 's32[1]{0}', space=sflag, size = 0x4, scoped, tag = 'scoped memory for tpu_custom_call.1']
    #allocation5 [shape = 's32[1]{0}', space=sflag, size = 0x4, scoped, tag = 'scoped memory for tpu_custom_call.1']
    #allocation6 [shape = 'u8[512]{0}', space=vmem, size = 0x400, scoped, tag = 'output window, operand 0, single buffered']
    %9 = vsyncpa [#allocation4], 0
    %10 = vsyncpa [#allocation5], 0
    // Predicated region
    $region2: #{tpu_custom_call.1} parent=1 // pred_check
      _
    $region3: #{tpu_custom_call.1} parent=1 // pred_check_branch
      %12 = sbr.rel (0) target = $region5
    $region4: #{tpu_custom_call.1} parent=1 // pred_region
      %s14 = ssub.s32 128, 128
      %15 = vsyncadd [#allocation4], %s14
      %s17 = sshll.u32 [#allocation3], 4
      %s18 = int_to_ptr.vmem [resolvable:$true] %s17
      %20 = dma.hbm_to_vmem [thread:$0]  %s0, 128, %s18, [#allocation4]
    $region5: #{tpu_custom_call.1} parent=1 // pred_fallthru
      _
    // Predicated region
    $region6: #{tpu_custom_call.1} parent=1 // pred_check
      _
    $region7: #{tpu_custom_call.1} parent=1 // pred_check_branch
      %22 = sbr.rel (0) target = $region9
    $region8: #{tpu_custom_call.1} parent=1 // pred_region
      _
    $region9: #{tpu_custom_call.1} parent=1 // pred_fallthru
      _
    // Predicated region
    $region10: #{tpu_custom_call.1} parent=1 // pred_check
      _
    $region11: #{tpu_custom_call.1} parent=1 // pred_check_branch
      %24 = sbr.rel (0) target = $region13
    $region12: #{tpu_custom_call.1} parent=1 // pred_region
      _
    $region13: #{tpu_custom_call.1} parent=1 // pred_fallthru
      _
    // Predicated region
    $region14: #{tpu_custom_call.1} parent=1 // pred_check
      _
    $region15: #{tpu_custom_call.1} parent=1 // pred_check_branch
      %26 = sbr.rel (0) target = $region17
    $region16: #{tpu_custom_call.1} parent=1 // pred_region
      %27 = dma.done [#allocation4], 128
    $region17: #{tpu_custom_call.1} parent=1 // pred_fallthru
      _
    %v28 = vld [vmem:[#allocation3] sm:$0xff]
    %v29 = vld [vmem:[%s1] sm:$0x1]
    %v31 = vlaneseq
    %v32 = vshrl.u32 %v31, 7
    %v33 = vsub.s32 0, %v32
    %v34 = vrot.slane %v29, %v33
    %v36 = vmul.f32 %v28, %v34
    %vm37 = vcmask 261120
    %v38 = vsel %vm37, %v36, 0.0
    %39 = vadd.xlane.f32.xlu0 %v38
    %v40 = vpop.xlane.xlu0 %39
    %s41 = sld [smem:[#allocation2]]
    %v42 = vstv %s41
    %v43 = vadd.f32 %v40, %v42
    %v45 = vlaneseq
    %v46 = vand.u32 %v45, 127
    %v47 = vlaneseq
    %v48 = vshrl.u32 %v47, 7
    %v49 = vsub.s32 %v46, %v48
    %v50 = vrot.slane %v43, %v49
    %vm52 = vcmask 57344
    %53 = vst.msk [vmem:[#allocation6] sm:$0x1] %vm52, %v50
    // Predicated region
    $region18: #{tpu_custom_call.1} parent=1 // pred_check
      _
    $region19: #{tpu_custom_call.1} parent=1 // pred_check_branch
      %55 = sbr.rel (0) target = $region21
    $region20: #{tpu_custom_call.1} parent=1 // pred_region
      %s57 = ssub.s32 16, 16
      %58 = vsyncadd [#allocation5], %s57
      %s60 = sshll.u32 [#allocation6], 4
      %s61 = int_to_ptr.vmem [resolvable:$true] %s60
      %63 = dma.vmem_to_hbm [thread:$0]  %s61, 16, %s3, [#allocation5]
    $region21: #{tpu_custom_call.1} parent=1 // pred_fallthru
      _
    // Predicated region
    $region22: #{tpu_custom_call.1} parent=1 // pred_check
      _
    $region23: #{tpu_custom_call.1} parent=1 // pred_check_branch
      %65 = sbr.rel (0) target = $region25
    $region24: #{tpu_custom_call.1} parent=1 // pred_region
      %66 = dma.done [#allocation5], 16
    $region25: #{tpu_custom_call.1} parent=1 // pred_fallthru
      _
    %67 = vsyncpa [#allocation4], 1
    %68 = vsyncpa [#allocation5], 1

</llo_original>
